<compile_context>
chip_gen: v5e
topology: v5e:2x2
jax: 0.10.0
libtpu: 0.0.40
codegen_flags: <defaults>
</compile_context>

<pallas_src>
import functools

import jax
import jax.numpy as jnp
from jax import lax
from jax.experimental import pallas as pl
from jax.experimental.pallas import tpu as pltpu


def _batch_criterion_kernel(x_row_ref, x_all_ref, o_ref, *, negM, invT, B, TM):
    half = B // 2
    row0 = pl.program_id(0) * TM

    x_row = x_row_ref[...]                               # (TM, D), native dtype
    x_all = x_all_ref[...]                               # (B,  D), native dtype

    # Similarity strip on the MXU: sim[i, j] = x_row_i . x_j  (f32 accumulate),
    # contracting dim 1 of both operands (no explicit transpose of x_all).
    sim = lax.dot_general(
        x_row, x_all,
        dimension_numbers=(((1,), (1,)), ((), ())),
        preferred_element_type=jnp.float32)              # (TM, B)

    # exp(sim / T): fold 1/T as a cheap VPU multiply (no divides on the strip).
    exp_sim = jnp.exp(sim * invT)                        # (TM, B)

    # In-kernel masks via iota comparisons (replaces the (B,B) mask inputs).
    col = lax.broadcasted_iota(jnp.int32, (TM, B), 1)
    row = lax.broadcasted_iota(jnp.int32, (TM, B), 0) + row0
    pos_col = (row + half) % B                           # positive-pair column

    # pos[i] = exp(x_i . x_{(i + B/2) % B} / T)
    pos = jnp.sum(jnp.where(col == pos_col, exp_sim, 0.0),
                  axis=1, keepdims=True)                 # (TM, 1)

    # all_prob = exp(x x^T / T) with the diagonal zeroed.
    all_prob = jnp.where(col == row, 0.0, exp_sim)       # (TM, B)
    row_sum = jnp.sum(all_prob, axis=1, keepdims=True)   # (TM, 1)

    if negM == 1.0:
        all_div = row_sum
    else:
        all_div = (row_sum - pos) * negM + pos

    inv_div = pl.reciprocal(all_div)                     # (TM, 1), per-row only
    lnPmt = pos * inv_div                                # (TM, 1)

    # sum_j log(1 - all_prob[i,j]/all_div[i]) - log(1 - lnPmt[i]), fused strip.
    # (zeroed diagonal contributes log1p(0) = 0, matching the reference)
    lnPon = jnp.sum(jnp.log1p(-all_prob * inv_div), axis=1, keepdims=True) \
        - jnp.log1p(-lnPmt)                              # (TM, 1)

    # Per-row contribution; scalar reduction happens outside the kernel.
    o_ref[...] = jnp.log(lnPmt) + negM * lnPon           # (TM, 1)


def _pick_tile(B):
    """Largest row-tile from a fixed menu that divides B (falls back to B)."""
    for tm in (256, 128, 64, 32, 16, 8):
        if B % tm == 0:
            return tm
    return B


def batch_criterion(x, targets=None, *, negM=1.0, T=0.1):
    """Pallas implementation of BatchCriterion.forward.

    x: (B, D) float array (B = 2 * batchSize "paired" samples), f32 or bf16.
    targets: unused (kept for signature parity with the PyTorch module).
    Returns a scalar float32 loss.
    """
    del targets  # unused in the PyTorch forward as well
    B, D = x.shape
    TM = _pick_tile(B)
    nblk = B // TM

    kernel = functools.partial(
        _batch_criterion_kernel,
        negM=float(negM), invT=1.0 / float(T), B=B, TM=TM)

    itemsize = jnp.dtype(x.dtype).itemsize
    cost = pl.CostEstimate(
        flops=2 * B * B * D,                 # x @ x^T
        transcendentals=2 * B * B + 4 * B,   # exp + log1p per element (+ row ops)
        bytes_accessed=2 * B * D * itemsize + B * 4)

    per_row = pl.pallas_call(
        kernel,
        out_shape=jax.ShapeDtypeStruct((B, 1), jnp.float32),
        grid=(nblk,),
        in_specs=[
            pl.BlockSpec((TM, D), lambda i: (i, 0)),   # pipelined row strip
            pl.BlockSpec((B, D), lambda i: (0, 0)),    # full x, stays resident
        ],
        out_specs=pl.BlockSpec((TM, 1), lambda i: (i, 0)),
        compiler_params=pltpu.CompilerParams(
            dimension_semantics=("parallel",)),        # shards across v7x TCs
        cost_estimate=cost,
    )(x, x)

    return -jnp.sum(per_row) / B


def _reference(x, negM, T):
    """Pure-JAX reference mirroring the PyTorch forward, for verification."""
    x = x.astype(jnp.float32)
    B = x.shape[0]
    half = B // 2
    reordered = jnp.concatenate([x[half:], x[:half]], axis=0)
    pos = jnp.exp(jnp.sum(x * reordered, axis=1) / T)
    all_prob = jnp.exp(x @ x.T / T) * (1.0 - jnp.eye(B, dtype=jnp.float32))
    if negM == 1.0:
        all_div = all_prob.sum(1)
    else:
        all_div = (all_prob.sum(1) - pos) * negM + pos
    lnPmt = pos / all_div
    lnPon = jnp.log(1.0 - all_prob / all_div[:, None]).sum(1) \
        - jnp.log(1.0 - lnPmt)
    loss = -(jnp.sum(jnp.log(lnPmt)) + negM * jnp.sum(lnPon)) / B
    return loss


if __name__ == "__main__":
    # Small shapes consistent with the module: batchSize=4 -> B = 2*4 = 8
    # paired samples, feature dim D = 32.
    batch_size = 4
    B = 2 * batch_size
    D = 32
    negM = 1.0
    T = 0.1

    key = jax.random.PRNGKey(0)
    x = jax.random.normal(key, (B, D), dtype=jnp.float32)
    # Features are L2-normalized in this loss (keeps exp(sim/T) in f32 range).
    x = x / jnp.linalg.norm(x, axis=1, keepdims=True)
    targets = jnp.arange(B, dtype=jnp.int32)  # unused, parity with PyTorch

    loss = batch_criterion(x, targets, negM=negM, T=T)
    loss = jax.block_until_ready(loss)

    ref = _reference(x, negM, T)
    assert jnp.allclose(loss, ref, rtol=1e-4, atol=1e-4), (loss, ref)

    print("KERNEL_OK")
</pallas_src>

<mosaic_0001>
module attributes {stable_mosaic.version = 11 : i64} {
  func.func @_batch_criterion_kernel(%arg0: i32, %arg1: memref<8x32xf32, #tpu.memory_space<vmem>>, %arg2: memref<8x32xf32, #tpu.memory_space<vmem>>, %arg3: memref<8x1xf32, #tpu.memory_space<vmem>>) attributes {dimension_semantics = [#tpu.dimension_semantics<parallel>], iteration_bounds = array<i64: 1>, scalar_prefetch = 0 : i64, scratch_operands = 0 : i64, tpu.core_type = #tpu.core_type<tc>, window_params = [{transform_indices = @transform_0, window_bounds = array<i64: 8, 32>}, {pipeline_mode = #tpu.pipeline_mode<synchronous>, transform_indices = @transform_1, window_bounds = array<i64: 8, 32>}, {transform_indices = @transform_2, window_bounds = array<i64: 8, 1>}]} {
    %c8_i32 = arith.constant 8 : i32
    %0 = arith.muli %arg0, %c8_i32 : i32
    %c0 = arith.constant 0 : index
    %c0_0 = arith.constant 0 : index
    %1 = vector.load %arg1[%c0, %c0_0] : memref<8x32xf32, #tpu.memory_space<vmem>>, vector<8x32xf32>
    %c0_1 = arith.constant 0 : index
    %c0_2 = arith.constant 0 : index
    %2 = vector.load %arg2[%c0_1, %c0_2] : memref<8x32xf32, #tpu.memory_space<vmem>>, vector<8x32xf32>
    %cst = arith.constant dense<0.000000e+00> : vector<8x8xf32>
    %3 = tpu.matmul %1, %2, %cst {dimension_numbers = #tpu.dot_dimension_numbers<[1], [1], [0], [0], [0, 0, 1, 0], [], []>} : vector<8x32xf32>, vector<8x32xf32>, vector<8x8xf32> -> vector<8x8xf32>
    %cst_3 = arith.constant 1.000000e+01 : f32
    %4 = vector.broadcast %cst_3 : f32 to vector<8x8xf32>
    %5 = arith.mulf %3, %4 : vector<8x8xf32>
    %6 = math.exp %5 : vector<8x8xf32>
    %7 = tpu.iota {dimensions = array<i32: 1>} : vector<8x8xi32>
    %8 = tpu.iota {dimensions = array<i32: 0>} : vector<8x8xi32>
    %9 = vector.broadcast %0 : i32 to vector<8x8xi32>
    %10 = arith.addi %8, %9 : vector<8x8xi32>
    %c4_i32 = arith.constant 4 : i32
    %11 = vector.broadcast %c4_i32 : i32 to vector<8x8xi32>
    %12 = arith.addi %10, %11 : vector<8x8xi32>
    %c8_i32_4 = arith.constant 8 : i32
    %c0_i32 = arith.constant 0 : i32
    %13 = arith.cmpi eq, %c8_i32_4, %c0_i32 : i32
    %c1_i32 = arith.constant 1 : i32
    %14 = arith.select %13, %c1_i32, %c8_i32_4 : i32
    %15 = vector.broadcast %14 : i32 to vector<8x8xi32>
    %16 = arith.remsi %12, %15 : vector<8x8xi32>
    %c0_i32_5 = arith.constant 0 : i32
    %17 = vector.broadcast %c0_i32_5 : i32 to vector<8x8xi32>
    %18 = arith.cmpi ne, %16, %17 : vector<8x8xi32>
    %c0_i32_6 = arith.constant 0 : i32
    %19 = vector.broadcast %c0_i32_6 : i32 to vector<8x8xi32>
    %20 = arith.cmpi slt, %16, %19 : vector<8x8xi32>
    %c0_i32_7 = arith.constant 0 : i32
    %21 = arith.cmpi slt, %14, %c0_i32_7 : i32
    %22 = vector.broadcast %21 : i1 to vector<8x8xi1>
    %23 = vector.broadcast %22 : vector<8x8xi1> to vector<8x8xi1>
    %24 = arith.xori %20, %23 : vector<8x8xi1>
    %25 = arith.andi %24, %18 : vector<8x8xi1>
    %26 = vector.broadcast %14 : i32 to vector<8x8xi32>
    %27 = arith.addi %16, %26 : vector<8x8xi32>
    %28 = arith.select %25, %27, %16 : vector<8x8xi1>, vector<8x8xi32>
    %29 = arith.cmpi eq, %7, %28 : vector<8x8xi32>
    %cst_8 = arith.constant 0.000000e+00 : f32
    %30 = vector.broadcast %cst_8 : f32 to vector<8x8xf32>
    %31 = arith.select %29, %6, %30 : vector<8x8xi1>, vector<8x8xf32>
    %cst_9 = arith.constant dense<0.000000e+00> : vector<8xf32>
    %32 = vector.multi_reduction <add>, %31, %cst_9 [1] : vector<8x8xf32> to vector<8xf32>
    %33 = vector.shape_cast %32 : vector<8xf32> to vector<8x1xf32>
    %34 = arith.cmpi eq, %7, %10 : vector<8x8xi32>
    %cst_10 = arith.constant 0.000000e+00 : f32
    %35 = vector.broadcast %cst_10 : f32 to vector<8x8xf32>
    %36 = arith.select %34, %35, %6 : vector<8x8xi1>, vector<8x8xf32>
    %cst_11 = arith.constant dense<0.000000e+00> : vector<8xf32>
    %37 = vector.multi_reduction <add>, %36, %cst_11 [1] : vector<8x8xf32> to vector<8xf32>
    %38 = vector.shape_cast %37 : vector<8xf32> to vector<8x1xf32>
    %39 = tpu.reciprocal %38 : vector<8x1xf32> -> vector<8x1xf32>
    %40 = arith.mulf %33, %39 : vector<8x1xf32>
    %cst_12 = arith.constant 0.000000e+00 : f32
    %41 = vector.broadcast %cst_12 : f32 to vector<8x8xf32>
    %42 = arith.subf %41, %36 : vector<8x8xf32>
    %43 = vector.broadcast %39 : vector<8x1xf32> to vector<8x8xf32>
    %44 = arith.mulf %42, %43 : vector<8x8xf32>
    %45 = math.log1p %44 : vector<8x8xf32>
    %cst_13 = arith.constant dense<0.000000e+00> : vector<8xf32>
    %46 = vector.multi_reduction <add>, %45, %cst_13 [1] : vector<8x8xf32> to vector<8xf32>
    %47 = vector.shape_cast %46 : vector<8xf32> to vector<8x1xf32>
    %cst_14 = arith.constant 0.000000e+00 : f32
    %48 = vector.broadcast %cst_14 : f32 to vector<8x1xf32>
    %49 = arith.subf %48, %40 : vector<8x1xf32>
    %50 = math.log1p %49 : vector<8x1xf32>
    %51 = arith.subf %47, %50 : vector<8x1xf32>
    %52 = math.log %40 : vector<8x1xf32>
    %cst_15 = arith.constant 1.000000e+00 : f32
    %53 = vector.broadcast %cst_15 : f32 to vector<8x1xf32>
    %54 = arith.mulf %53, %51 : vector<8x1xf32>
    %55 = arith.addf %52, %54 : vector<8x1xf32>
    %c0_16 = arith.constant 0 : index
    %c0_17 = arith.constant 0 : index
    %56 = vector.load %arg3[%c0_16, %c0_17] : memref<8x1xf32, #tpu.memory_space<vmem>>, vector<8x1xf32>
    tpu.vector_store %arg3[%c0_16, %c0_17], %55 {strides = array<i32>} : memref<8x1xf32, #tpu.memory_space<vmem>>, vector<8x1xf32>,
    return
  }
  func.func @transform_0(%arg0: i32) -> (i32, i32) {
    %c0_i32 = arith.constant 0 : i32
    %c0_i32_0 = arith.constant 0 : i32
    return %arg0, %c0_i32 : i32, i32
  }
  func.func @transform_1(%arg0: i32) -> (i32, i32) {
    %c0_i32 = arith.constant 0 : i32
    %c0_i32_0 = arith.constant 0 : i32
    %c0_i32_1 = arith.constant 0 : i32
    return %c0_i32, %c0_i32_0 : i32, i32
  }
  func.func @transform_2(%arg0: i32) -> (i32, i32) {
    %c0_i32 = arith.constant 0 : i32
    %c0_i32_0 = arith.constant 0 : i32
    return %arg0, %c0_i32 : i32, i32
  }
}

</mosaic_0001>

<llo_original>
// kernel: tpu_custom_call.1
$region0: #{tpu_custom_call.1}
  #allocation0 [shape = 'u32[]', space=smem, size = 0x4, offset = 0x4, fixed_abs, tag = 'smem constant byte address 0x4 - core index']
  #allocation1 [shape = 'u32[72,128]{1,0:T(1,128)}', space=vmem, size = 0x9000, scoped, tag = 'internal scratch']
  %s0 = inlined_call_operand.hbm [shape: f32[8,32], index: 0, kind: input, shape index: {}]
  %s1 = inlined_call_operand.hbm [shape: f32[8,32], index: 1, kind: input, shape index: {}]
  %s2 = inlined_call_operand.vmem [shape: f32[8,1], index: 2, kind: output, shape index: {}]
  %s3 = sld [smem:[#allocation0]]
  $region26: #{tpu_custom_call.1} parent=0
    _
  %s5 = ssub.s32 1, %s3
  %s6 = scalar_select 0, %s5, %s3
  $region1: #{tpu_custom_call.1} parent=0
    #allocation2 [shape = 'u8[4096]{0}', space=vmem, size = 0x1000, scoped, tag = 'input window, operand 0, single buffered']
    #allocation3 [shape = 's32[1]{0}', space=sflag, size = 0x4, scoped, tag = 'scoped memory for tpu_custom_call.1']
    #allocation4 [shape = 'u8[4096]{0}', space=vmem, size = 0x1000, scoped, tag = 'input window, operand 1, single buffered']
    #allocation5 [shape = 's32[1]{0}', space=sflag, size = 0x4, scoped, tag = 'scoped memory for tpu_custom_call.1']
    %7 = vsyncpa [#allocation3], 0
    %8 = vsyncpa [#allocation5], 0
    // Predicated region
    $region2: #{tpu_custom_call.1} parent=1 // pred_check
      _
    $region3: #{tpu_custom_call.1} parent=1 // pred_check_branch
      %10 = sbr.rel (0) target = $region5
    $region4: #{tpu_custom_call.1} parent=1 // pred_region
      %12 = vsyncadd [#allocation3], 0
      %s14 = sshll.u32 %s0, 4
      %s15 = int_to_ptr.hbm [resolvable:$true] %s14
      %s16 = sshll.u32 [#allocation2], 4
      %s17 = int_to_ptr.vmem [resolvable:$true] %s16
      %19 = dma.hbm_to_vmem [thread:$0]  %s15, 128, %s17, [#allocation3]
    $region5: #{tpu_custom_call.1} parent=1 // pred_fallthru
      _
    // Predicated region
    $region6: #{tpu_custom_call.1} parent=1 // pred_check
      _
    $region7: #{tpu_custom_call.1} parent=1 // pred_check_branch
      %21 = sbr.rel (0) target = $region9
    $region8: #{tpu_custom_call.1} parent=1 // pred_region
      %23 = vsyncadd [#allocation5], 0
      %s25 = sshll.u32 %s1, 4
      %s26 = int_to_ptr.hbm [resolvable:$true] %s25
      %s27 = sshll.u32 [#allocation4], 4
      %s28 = int_to_ptr.vmem [resolvable:$true] %s27
      %30 = dma.hbm_to_vmem [thread:$0]  %s26, 128, %s28, [#allocation5]
    $region9: #{tpu_custom_call.1} parent=1 // pred_fallthru
      _
    // Predicated region
    $region10: #{tpu_custom_call.1} parent=1 // pred_check
      _
    $region11: #{tpu_custom_call.1} parent=1 // pred_check_branch
      %32 = sbr.rel (0) target = $region13
    $region12: #{tpu_custom_call.1} parent=1 // pred_region
      %34 = dma.done [#allocation3], 128
    $region13: #{tpu_custom_call.1} parent=1 // pred_fallthru
      _
    // Predicated region
    $region14: #{tpu_custom_call.1} parent=1 // pred_check
      _
    $region15: #{tpu_custom_call.1} parent=1 // pred_check_branch
      %36 = sbr.rel (0) target = $region17
    $region16: #{tpu_custom_call.1} parent=1 // pred_region
      %38 = dma.done [#allocation5], 128
    $region17: #{tpu_custom_call.1} parent=1 // pred_fallthru
      _
    %s39 = smul.u32 0, 8
    %v40 = vld [vmem:[#allocation2] sm:$0xff]
    %v41 = vld [vmem:[#allocation4] sm:$0xff]
    %vm42 = vcmask 261120
    %v44 = vsel %vm42, %v40, 0
    %v47 = vsel %vm42, %v41, 0
    %49 = vmatpush.xpose.msra.mxu0 0.0
    %50 = vmatpush.xpose.msra.mxu0 0.0
    %51 = vmatpush.xpose.msra.mxu0 0.0
    %52 = vmatpush.xpose.msra.mxu0 0.0
    %53 = vmatpush.xpose.msra.mxu0 0.0
    %54 = vmatpush.xpose.msra.mxu0 0.0
    %55 = vmatpush.xpose.msra.mxu0 0.0
    %56 = vmatpush.xpose.msra.mxu0 0.0
    %57 = vmatpush.xpose.msra.mxu0 0.0
    %58 = vmatpush.xpose.msra.mxu0 0.0
    %59 = vmatpush.xpose.msra.mxu0 0.0
    %60 = vmatpush.xpose.msra.mxu0 0.0
    %61 = vmatpush.xpose.msra.mxu0 0.0
    %62 = vmatpush.xpose.msra.mxu0 0.0
    %63 = vmatpush.xpose.msra.mxu0 0.0
    %64 = vmatpush.xpose.msra.mxu0 %v47
    %65 = vmatmul.f32.gmra.mxu0 %v44
    %v66 = vpop.f32.mrf.mxu0
    %v67 = vadd.f32 0.0, %v66
    %68 = vdwg.mxu0
    %v69 = vmul.f32 %v67, 10.0
    %v70 = vmul.f32 %v69, 1.442695
    %v71 = vpow.pop %v70
    %v72 = vlaneseq
    %v73 = vand.u32 %v72, 127
    %v74 = vlaneseq
    %v75 = vshrl.u32 %v74, 7
    %v76 = vstv %s39
    %v77 = vadd.s32 %v75, %v76
    %v78 = vadd.s32 %v77, 4
    %vm79 = vcmp.lt.s32.totalorder %v78, 0
    %v80 = vsub.s32 0, %v78
    %v81 = vsel %vm79, %v80, %v78
    %v82 = vshrl.u32 %v81, 3
    %v83 = vand.u32 %v81, 7
    %v84 = vsub.s32 0, %v83
    %v85 = vsel %vm79, %v84, %v83
    %vm86 = vcmp.ne.s32.totalorder %v85, 0
    %vm87 = vcmp.lt.s32.totalorder %v85, 0
    %vm88 = vmand %vm87, %vm86
    %v89 = vadd.s32 %v85, 8
    %v90 = vsel %vm88, %v89, %v85
    %vm91 = vcmp.eq.s32.totalorder %v73, %v90
    %v92 = vsel %vm91, %v71, 0.0
    %vm93 = vcmask 64512
    %v94 = vsel %vm93, %v92, 0.0
    %95 = vadd.xlane.f32.xlu0 %v94
    %v96 = vpop.xlane.xlu0 %95
    %vm97 = vcmp.eq.s32.totalorder %v73, %v77
    %v98 = vsel %vm97, 0.0, %v71
    %v99 = vsel %vm93, %v98, 0.0
    %100 = vadd.xlane.f32.xlu0 %v99
    %v101 = vpop.xlane.xlu0 %100
    %v102 = vrcp.pop %v101
    %v103 = vmul.f32 %v101, %v102
    %v104 = vsub.f32 1.0, %v103
    %v105 = vmul.f32 %v102, %v104
    %v106 = vadd.f32 %v102, %v105
    %vm107 = vweird.f32 %v101
    %vm108 = vweird.f32 %v102
    %vm109 = vmor %vm107, %vm108
    %v110 = vsel %vm109, %v102, %v106
    %v111 = vand.u32 2147483647, %v101
    %vm112 = vcmp.eq.f32.partialorder %v111, 8.507059e+37
    %v113 = vand.u32 %v101, 2147483648
    %v114 = vor.u32 1.1754944e-38, %v113
    %v115 = vsel %vm112, %v114, %v110
    %v116 = vmul.f32 %v96, %v115
    %v117 = vsub.f32 0.0, %v98
    %v118 = vmul.f32 %v117, %v115
    %v119 = vadd.f32 %v118, 1.0
    %v120 = vlog2.pop %v119
    %v121 = vmul.f32 %v120, 0.6931472
    %v122 = vmul.f32 -0.5, %v118
    %v123 = vadd.f32 %v122, 1.0
    %v124 = vmul.f32 %v123, %v118
    %v125 = vand.u32 2147483647, %v118
    %vm126 = vcmp.lt.f32.partialorder %v125, 0.0004427343
    %v127 = vsel %vm126, %v124, %v121
    %v128 = vsel %vm93, %v127, 0.0
    %129 = vadd.xlane.f32.xlu0 %v128
    %v130 = vpop.xlane.xlu0 %129
    %v131 = vsub.f32 0.0, %v116
    %v132 = vadd.f32 %v131, 1.0
    %v133 = vlog2.pop %v132
    %v134 = vmul.f32 %v133, 0.6931472
    %v135 = vmul.f32 -0.5, %v131
    %v136 = vadd.f32 %v135, 1.0
    %v137 = vmul.f32 %v136, %v131
    %v138 = vand.u32 2147483647, %v131
    %vm139 = vcmp.lt.f32.partialorder %v138, 0.0004427343
    %v140 = vsel %vm139, %v137, %v134
    %v141 = vsub.f32 %v130, %v140
    %v142 = vlog2.pop %v116
    %v143 = vmul.f32 %v142, 0.6931472
    %v144 = vadd.f32 %v143, %v141
    %vm145 = vcmask 7168
    %146 = vst.msk [vmem:[%s2] sm:$0xff] %vm145, %v144
    // Predicated region
    $region18: #{tpu_custom_call.1} parent=1 // pred_check
      _
    $region19: #{tpu_custom_call.1} parent=1 // pred_check_branch
      %148 = sbr.rel (0) target = $region21
    $region20: #{tpu_custom_call.1} parent=1 // pred_region
      _
    $region21: #{tpu_custom_call.1} parent=1 // pred_fallthru
      _
    // Predicated region
    $region22: #{tpu_custom_call.1} parent=1 // pred_check
      _
    $region23: #{tpu_custom_call.1} parent=1 // pred_check_branch
      %150 = sbr.rel (0) target = $region25
    $region24: #{tpu_custom_call.1} parent=1 // pred_region
      _
    $region25: #{tpu_custom_call.1} parent=1 // pred_fallthru
      _
    %151 = vsyncpa [#allocation3], 1
    %152 = vsyncpa [#allocation5], 1

</llo_original>
